<compile_context>
chip_gen: v6e
topology: v6e:2x2x1
jax: 0.10.0
libtpu: 0.0.40
codegen_flags: <defaults>
</compile_context>

<pallas_src>
import math
import jax
import jax.numpy as jnp
from jax.experimental import pallas as pl
from jax.experimental.pallas import tpu as pltpu


LANE = 128      # vreg lane width
SUBLANE = 8     # vreg sublane count


def _round_up(x, m):
    return (x + m - 1) // m * m


def _mapping_kernel(z_ref,
                    w0_ref, b0_ref,
                    w1_ref, b1_ref,
                    w2_ref, b2_ref,
                    w3f_ref, b3f_ref,
                    w3p_ref, b3p_ref,
                    freq_ref, phase_ref):
    """Fused 4-layer MLP + LeakyReLU(0.2); final layer split into two
    lane-dense matmuls writing freq / phase outputs directly."""

    def leaky_relu(x):
        return jnp.where(x > 0, x, 0.2 * x)

    h = jnp.dot(z_ref[...], w0_ref[...], preferred_element_type=jnp.float32)
    h = leaky_relu(h + b0_ref[...])

    h = jnp.dot(h, w1_ref[...], preferred_element_type=jnp.float32)
    h = leaky_relu(h + b1_ref[...])

    h = jnp.dot(h, w2_ref[...], preferred_element_type=jnp.float32)
    h = leaky_relu(h + b2_ref[...])

    freq_ref[...] = (
        jnp.dot(h, w3f_ref[...], preferred_element_type=jnp.float32)
        + b3f_ref[...]
    ).astype(freq_ref.dtype)
    phase_ref[...] = (
        jnp.dot(h, w3p_ref[...], preferred_element_type=jnp.float32)
        + b3p_ref[...]
    ).astype(phase_ref.dtype)


def custom_mapping_network(z, params, *, tb=None):
    """Forward pass.

    z: (B, z_dim) float32.
    params: list of 4 tuples (W_T, b) with W_T (in_features, out_features),
            b (1, out_features).
    Returns (frequencies, phase_shifts), each (B, out_dim // 2).
    """
    B, z_dim = z.shape
    (w0, b0), (w1, b1), (w2, b2), (w3, b3) = params
    hidden = w0.shape[1]
    out_dim = w3.shape[1]
    half = out_dim // 2

    # --- lane-dense padding of the feature dims --------------------------
    z_pad = _round_up(z_dim, LANE)
    h_pad = _round_up(hidden, LANE)
    half_pad = _round_up(half, LANE)

    # Split the final layer so each output half is its own contiguous,
    # lane-aligned matmul result (no in-kernel slicing of the output).
    w3f, w3p = w3[:, :half], w3[:, half:]
    b3f, b3p = b3[:, :half], b3[:, half:]

    def pad2(a, rows, cols):
        return jnp.pad(a, ((0, rows - a.shape[0]), (0, cols - a.shape[1])))

    w0p = pad2(w0, z_pad, h_pad); b0p = pad2(b0, 1, h_pad)
    w1p = pad2(w1, h_pad, h_pad); b1p = pad2(b1, 1, h_pad)
    w2p = pad2(w2, h_pad, h_pad); b2p = pad2(b2, 1, h_pad)
    w3fp = pad2(w3f, h_pad, half_pad); b3fp = pad2(b3f, 1, half_pad)
    w3pp = pad2(w3p, h_pad, half_pad); b3pp = pad2(b3p, 1, half_pad)

    # --- batch tiling ------------------------------------------------------
    if tb is None:
        # Small B: one tile.  Large B: 512-row tiles (sweepable 256-1024);
        # per-step VMEM stays far below scoped limits on v5e/v6e/v7x.
        tb = min(512, _round_up(B, SUBLANE))
    tb = _round_up(tb, SUBLANE)
    b_pad = _round_up(B, tb)
    n_tiles = b_pad // tb

    zp = jnp.pad(z, ((0, b_pad - B), (0, z_pad - z_dim)))

    def _tiled_spec(shape):
        # batch-tiled operand: block index advances along the batch grid axis
        return pl.BlockSpec(shape, lambda i: (0,) * (len(shape) - 2) + (i, 0))

    def _const_spec(shape):
        # VMEM-resident weight/bias: same block every grid step
        return pl.BlockSpec(shape, lambda i, _r=len(shape): (0,) * _r)

    in_specs = [
        _tiled_spec((tb, z_pad)),
        _const_spec((z_pad, h_pad)), _const_spec((1, h_pad)),
        _const_spec((h_pad, h_pad)), _const_spec((1, h_pad)),
        _const_spec((h_pad, h_pad)), _const_spec((1, h_pad)),
        _const_spec((h_pad, half_pad)), _const_spec((1, half_pad)),
        _const_spec((h_pad, half_pad)), _const_spec((1, half_pad)),
    ]
    out_specs = (
        pl.BlockSpec((tb, half_pad), lambda i: (i, 0)),
        pl.BlockSpec((tb, half_pad), lambda i: (i, 0)),
    )
    out_shape = (
        jax.ShapeDtypeStruct((b_pad, half_pad), jnp.float32),
        jax.ShapeDtypeStruct((b_pad, half_pad), jnp.float32),
    )

    freqs_p, phases_p = pl.pallas_call(
        _mapping_kernel,
        grid=(n_tiles,),
        out_shape=out_shape,
        in_specs=in_specs,
        out_specs=out_specs,
        compiler_params=pltpu.CompilerParams(
            dimension_semantics=("parallel",)),
    )(zp, w0p, b0p, w1p, b1p, w2p, b2p, w3fp, b3fp, w3pp, b3pp)

    # Strip the batch / lane padding back off.
    return freqs_p[:B, :half], phases_p[:B, :half]


def init_params(key, z_dim, map_hidden_dim, map_output_dim):
    """Deterministic init mirroring kaiming_leaky_init (a=0.2, fan_in,
    leaky_relu) plus the 0.25 scaling of the last layer weight."""
    dims = [(z_dim, map_hidden_dim),
            (map_hidden_dim, map_hidden_dim),
            (map_hidden_dim, map_hidden_dim),
            (map_hidden_dim, map_output_dim)]
    gain = math.sqrt(2.0 / (1.0 + 0.2 ** 2))
    params = []
    for i, (fan_in, fan_out) in enumerate(dims):
        key, kw, kb = jax.random.split(key, 3)
        std = gain / math.sqrt(fan_in)
        # Store transposed: (in_features, out_features)
        w_t = std * jax.random.normal(kw, (fan_in, fan_out), dtype=jnp.float32)
        if i == len(dims) - 1:
            w_t = w_t * 0.25
        bound = 1.0 / math.sqrt(fan_in)
        b = jax.random.uniform(kb, (1, fan_out), dtype=jnp.float32,
                               minval=-bound, maxval=bound)
        params.append((w_t, b))
    return params


def reference_forward(z, params):
    """Pure-JAX reference for validation."""
    h = z
    for i, (w_t, b) in enumerate(params):
        h = h @ w_t + b
        if i < len(params) - 1:
            h = jnp.where(h > 0, h, 0.2 * h)
    half = h.shape[-1] // 2
    return h[..., :half], h[..., half:]


if __name__ == "__main__":
    key = jax.random.PRNGKey(0)
    B, z_dim, hidden, out_dim = 8, 32, 64, 32  # out split -> 16 freqs / 16 phases

    k_z, k_p = jax.random.split(key)
    z = jax.random.normal(k_z, (B, z_dim), dtype=jnp.float32)
    params = init_params(k_p, z_dim, hidden, out_dim)

    freqs, phases = custom_mapping_network(z, params)
    jax.block_until_ready((freqs, phases))

    ref_f, ref_p = reference_forward(z, params)
    assert freqs.shape == (B, out_dim // 2)
    assert phases.shape == (B, out_dim // 2)
    assert jnp.allclose(freqs, ref_f, atol=1e-4, rtol=1e-4)
    assert jnp.allclose(phases, ref_p, atol=1e-4, rtol=1e-4)

    print("KERNEL_OK")
</pallas_src>

<mosaic_0001>
module attributes {stable_mosaic.version = 11 : i64} {
  func.func @_mapping_kernel(%arg0: i32, %arg1: memref<8x128xf32, #tpu.memory_space<vmem>>, %arg2: memref<128x128xf32, #tpu.memory_space<vmem>>, %arg3: memref<1x128xf32, #tpu.memory_space<vmem>>, %arg4: memref<128x128xf32, #tpu.memory_space<vmem>>, %arg5: memref<1x128xf32, #tpu.memory_space<vmem>>, %arg6: memref<128x128xf32, #tpu.memory_space<vmem>>, %arg7: memref<1x128xf32, #tpu.memory_space<vmem>>, %arg8: memref<128x128xf32, #tpu.memory_space<vmem>>, %arg9: memref<1x128xf32, #tpu.memory_space<vmem>>, %arg10: memref<128x128xf32, #tpu.memory_space<vmem>>, %arg11: memref<1x128xf32, #tpu.memory_space<vmem>>, %arg12: memref<8x128xf32, #tpu.memory_space<vmem>>, %arg13: memref<8x128xf32, #tpu.memory_space<vmem>>) attributes {dimension_semantics = [#tpu.dimension_semantics<parallel>], iteration_bounds = array<i64: 1>, scalar_prefetch = 0 : i64, scratch_operands = 0 : i64, tpu.core_type = #tpu.core_type<tc>, window_params = [{transform_indices = @transform_0, window_bounds = array<i64: 8, 128>}, {pipeline_mode = #tpu.pipeline_mode<synchronous>, transform_indices = @transform_1, window_bounds = array<i64: 128, 128>}, {pipeline_mode = #tpu.pipeline_mode<synchronous>, transform_indices = @transform_2, window_bounds = array<i64: 1, 128>}, {pipeline_mode = #tpu.pipeline_mode<synchronous>, transform_indices = @transform_3, window_bounds = array<i64: 128, 128>}, {pipeline_mode = #tpu.pipeline_mode<synchronous>, transform_indices = @transform_4, window_bounds = array<i64: 1, 128>}, {pipeline_mode = #tpu.pipeline_mode<synchronous>, transform_indices = @transform_5, window_bounds = array<i64: 128, 128>}, {pipeline_mode = #tpu.pipeline_mode<synchronous>, transform_indices = @transform_6, window_bounds = array<i64: 1, 128>}, {pipeline_mode = #tpu.pipeline_mode<synchronous>, transform_indices = @transform_7, window_bounds = array<i64: 128, 128>}, {pipeline_mode = #tpu.pipeline_mode<synchronous>, transform_indices = @transform_8, window_bounds = array<i64: 1, 128>}, {pipeline_mode = #tpu.pipeline_mode<synchronous>, transform_indices = @transform_9, window_bounds = array<i64: 128, 128>}, {pipeline_mode = #tpu.pipeline_mode<synchronous>, transform_indices = @transform_10, window_bounds = array<i64: 1, 128>}, {transform_indices = @transform_11, window_bounds = array<i64: 8, 128>}, {transform_indices = @transform_12, window_bounds = array<i64: 8, 128>}]} {
    %c0 = arith.constant 0 : index
    %c0_0 = arith.constant 0 : index
    %0 = vector.load %arg1[%c0, %c0_0] : memref<8x128xf32, #tpu.memory_space<vmem>>, vector<8x128xf32>
    %c0_1 = arith.constant 0 : index
    %c0_2 = arith.constant 0 : index
    %1 = vector.load %arg2[%c0_1, %c0_2] : memref<128x128xf32, #tpu.memory_space<vmem>>, vector<128x128xf32>
    %cst = arith.constant dense<0.000000e+00> : vector<8x128xf32>
    %2 = tpu.matmul %0, %1, %cst {dimension_numbers = #tpu.dot_dimension_numbers<[1], [0], [0], [1], [0, 0, 1, 1], [], []>} : vector<8x128xf32>, vector<128x128xf32>, vector<8x128xf32> -> vector<8x128xf32>
    %c0_3 = arith.constant 0 : index
    %c0_4 = arith.constant 0 : index
    %3 = vector.load %arg3[%c0_3, %c0_4] : memref<1x128xf32, #tpu.memory_space<vmem>>, vector<1x128xf32>
    %4 = vector.broadcast %3 : vector<1x128xf32> to vector<8x128xf32>
    %5 = arith.addf %2, %4 : vector<8x128xf32>
    %cst_5 = arith.constant 0.000000e+00 : f32
    %6 = vector.broadcast %cst_5 : f32 to vector<8x128xf32>
    %7 = arith.cmpf ogt, %5, %6 : vector<8x128xf32>
    %cst_6 = arith.constant 2.000000e-01 : f32
    %8 = vector.broadcast %cst_6 : f32 to vector<8x128xf32>
    %9 = arith.mulf %8, %5 : vector<8x128xf32>
    %10 = arith.select %7, %5, %9 : vector<8x128xi1>, vector<8x128xf32>
    %c0_7 = arith.constant 0 : index
    %c0_8 = arith.constant 0 : index
    %11 = vector.load %arg4[%c0_7, %c0_8] : memref<128x128xf32, #tpu.memory_space<vmem>>, vector<128x128xf32>
    %cst_9 = arith.constant dense<0.000000e+00> : vector<8x128xf32>
    %12 = tpu.matmul %10, %11, %cst_9 {dimension_numbers = #tpu.dot_dimension_numbers<[1], [0], [0], [1], [0, 0, 1, 1], [], []>} : vector<8x128xf32>, vector<128x128xf32>, vector<8x128xf32> -> vector<8x128xf32>
    %c0_10 = arith.constant 0 : index
    %c0_11 = arith.constant 0 : index
    %13 = vector.load %arg5[%c0_10, %c0_11] : memref<1x128xf32, #tpu.memory_space<vmem>>, vector<1x128xf32>
    %14 = vector.broadcast %13 : vector<1x128xf32> to vector<8x128xf32>
    %15 = arith.addf %12, %14 : vector<8x128xf32>
    %cst_12 = arith.constant 0.000000e+00 : f32
    %16 = vector.broadcast %cst_12 : f32 to vector<8x128xf32>
    %17 = arith.cmpf ogt, %15, %16 : vector<8x128xf32>
    %cst_13 = arith.constant 2.000000e-01 : f32
    %18 = vector.broadcast %cst_13 : f32 to vector<8x128xf32>
    %19 = arith.mulf %18, %15 : vector<8x128xf32>
    %20 = arith.select %17, %15, %19 : vector<8x128xi1>, vector<8x128xf32>
    %c0_14 = arith.constant 0 : index
    %c0_15 = arith.constant 0 : index
    %21 = vector.load %arg6[%c0_14, %c0_15] : memref<128x128xf32, #tpu.memory_space<vmem>>, vector<128x128xf32>
    %cst_16 = arith.constant dense<0.000000e+00> : vector<8x128xf32>
    %22 = tpu.matmul %20, %21, %cst_16 {dimension_numbers = #tpu.dot_dimension_numbers<[1], [0], [0], [1], [0, 0, 1, 1], [], []>} : vector<8x128xf32>, vector<128x128xf32>, vector<8x128xf32> -> vector<8x128xf32>
    %c0_17 = arith.constant 0 : index
    %c0_18 = arith.constant 0 : index
    %23 = vector.load %arg7[%c0_17, %c0_18] : memref<1x128xf32, #tpu.memory_space<vmem>>, vector<1x128xf32>
    %24 = vector.broadcast %23 : vector<1x128xf32> to vector<8x128xf32>
    %25 = arith.addf %22, %24 : vector<8x128xf32>
    %cst_19 = arith.constant 0.000000e+00 : f32
    %26 = vector.broadcast %cst_19 : f32 to vector<8x128xf32>
    %27 = arith.cmpf ogt, %25, %26 : vector<8x128xf32>
    %cst_20 = arith.constant 2.000000e-01 : f32
    %28 = vector.broadcast %cst_20 : f32 to vector<8x128xf32>
    %29 = arith.mulf %28, %25 : vector<8x128xf32>
    %30 = arith.select %27, %25, %29 : vector<8x128xi1>, vector<8x128xf32>
    %c0_21 = arith.constant 0 : index
    %c0_22 = arith.constant 0 : index
    %31 = vector.load %arg8[%c0_21, %c0_22] : memref<128x128xf32, #tpu.memory_space<vmem>>, vector<128x128xf32>
    %cst_23 = arith.constant dense<0.000000e+00> : vector<8x128xf32>
    %32 = tpu.matmul %30, %31, %cst_23 {dimension_numbers = #tpu.dot_dimension_numbers<[1], [0], [0], [1], [0, 0, 1, 1], [], []>} : vector<8x128xf32>, vector<128x128xf32>, vector<8x128xf32> -> vector<8x128xf32>
    %c0_24 = arith.constant 0 : index
    %c0_25 = arith.constant 0 : index
    %33 = vector.load %arg9[%c0_24, %c0_25] : memref<1x128xf32, #tpu.memory_space<vmem>>, vector<1x128xf32>
    %34 = vector.broadcast %33 : vector<1x128xf32> to vector<8x128xf32>
    %35 = arith.addf %32, %34 : vector<8x128xf32>
    %c0_26 = arith.constant 0 : index
    %c0_27 = arith.constant 0 : index
    %36 = vector.load %arg12[%c0_26, %c0_27] : memref<8x128xf32, #tpu.memory_space<vmem>>, vector<8x128xf32>
    tpu.vector_store %arg12[%c0_26, %c0_27], %35 {strides = array<i32>} : memref<8x128xf32, #tpu.memory_space<vmem>>, vector<8x128xf32>,
    %c0_28 = arith.constant 0 : index
    %c0_29 = arith.constant 0 : index
    %37 = vector.load %arg10[%c0_28, %c0_29] : memref<128x128xf32, #tpu.memory_space<vmem>>, vector<128x128xf32>
    %cst_30 = arith.constant dense<0.000000e+00> : vector<8x128xf32>
    %38 = tpu.matmul %30, %37, %cst_30 {dimension_numbers = #tpu.dot_dimension_numbers<[1], [0], [0], [1], [0, 0, 1, 1], [], []>} : vector<8x128xf32>, vector<128x128xf32>, vector<8x128xf32> -> vector<8x128xf32>
    %c0_31 = arith.constant 0 : index
    %c0_32 = arith.constant 0 : index
    %39 = vector.load %arg11[%c0_31, %c0_32] : memref<1x128xf32, #tpu.memory_space<vmem>>, vector<1x128xf32>
    %40 = vector.broadcast %39 : vector<1x128xf32> to vector<8x128xf32>
    %41 = arith.addf %38, %40 : vector<8x128xf32>
    %c0_33 = arith.constant 0 : index
    %c0_34 = arith.constant 0 : index
    %42 = vector.load %arg13[%c0_33, %c0_34] : memref<8x128xf32, #tpu.memory_space<vmem>>, vector<8x128xf32>
    tpu.vector_store %arg13[%c0_33, %c0_34], %41 {strides = array<i32>} : memref<8x128xf32, #tpu.memory_space<vmem>>, vector<8x128xf32>,
    return
  }
  func.func @transform_0(%arg0: i32) -> (i32, i32) {
    %c0_i32 = arith.constant 0 : i32
    %c0_i32_0 = arith.constant 0 : i32
    return %arg0, %c0_i32 : i32, i32
  }
  func.func @transform_1(%arg0: i32) -> (i32, i32) {
    %c0_i32 = arith.constant 0 : i32
    %c0_i32_0 = arith.constant 0 : i32
    %c0_i32_1 = arith.constant 0 : i32
    return %c0_i32, %c0_i32_0 : i32, i32
  }
  func.func @transform_2(%arg0: i32) -> (i32, i32) {
    %c0_i32 = arith.constant 0 : i32
    %c0_i32_0 = arith.constant 0 : i32
    %c0_i32_1 = arith.constant 0 : i32
    return %c0_i32, %c0_i32_0 : i32, i32
  }
  func.func @transform_3(%arg0: i32) -> (i32, i32) {
    %c0_i32 = arith.constant 0 : i32
    %c0_i32_0 = arith.constant 0 : i32
    %c0_i32_1 = arith.constant 0 : i32
    return %c0_i32, %c0_i32_0 : i32, i32
  }
  func.func @transform_4(%arg0: i32) -> (i32, i32) {
    %c0_i32 = arith.constant 0 : i32
    %c0_i32_0 = arith.constant 0 : i32
    %c0_i32_1 = arith.constant 0 : i32
    return %c0_i32, %c0_i32_0 : i32, i32
  }
  func.func @transform_5(%arg0: i32) -> (i32, i32) {
    %c0_i32 = arith.constant 0 : i32
    %c0_i32_0 = arith.constant 0 : i32
    %c0_i32_1 = arith.constant 0 : i32
    return %c0_i32, %c0_i32_0 : i32, i32
  }
  func.func @transform_6(%arg0: i32) -> (i32, i32) {
    %c0_i32 = arith.constant 0 : i32
    %c0_i32_0 = arith.constant 0 : i32
    %c0_i32_1 = arith.constant 0 : i32
    return %c0_i32, %c0_i32_0 : i32, i32
  }
  func.func @transform_7(%arg0: i32) -> (i32, i32) {
    %c0_i32 = arith.constant 0 : i32
    %c0_i32_0 = arith.constant 0 : i32
    %c0_i32_1 = arith.constant 0 : i32
    return %c0_i32, %c0_i32_0 : i32, i32
  }
  func.func @transform_8(%arg0: i32) -> (i32, i32) {
    %c0_i32 = arith.constant 0 : i32
    %c0_i32_0 = arith.constant 0 : i32
    %c0_i32_1 = arith.constant 0 : i32
    return %c0_i32, %c0_i32_0 : i32, i32
  }
  func.func @transform_9(%arg0: i32) -> (i32, i32) {
    %c0_i32 = arith.constant 0 : i32
    %c0_i32_0 = arith.constant 0 : i32
    %c0_i32_1 = arith.constant 0 : i32
    return %c0_i32, %c0_i32_0 : i32, i32
  }
  func.func @transform_10(%arg0: i32) -> (i32, i32) {
    %c0_i32 = arith.constant 0 : i32
    %c0_i32_0 = arith.constant 0 : i32
    %c0_i32_1 = arith.constant 0 : i32
    return %c0_i32, %c0_i32_0 : i32, i32
  }
  func.func @transform_11(%arg0: i32) -> (i32, i32) {
    %c0_i32 = arith.constant 0 : i32
    %c0_i32_0 = arith.constant 0 : i32
    return %arg0, %c0_i32 : i32, i32
  }
  func.func @transform_12(%arg0: i32) -> (i32, i32) {
    %c0_i32 = arith.constant 0 : i32
    %c0_i32_0 = arith.constant 0 : i32
    return %arg0, %c0_i32 : i32, i32
  }
}

</mosaic_0001>

<llo_original>
// kernel: tpu_custom_call.1
$region0: #{tpu_custom_call.1}
  #allocation0 [shape = 'u32[]', space=smem, size = 0x4, offset = 0x4, fixed_abs, tag = 'smem constant byte address 0x4 - core index']
  #allocation1 [shape = 'u32[144,128]{1,0:T(1,128)}', space=vmem, size = 0x12000, scoped, tag = 'internal scratch']
  %s0 = inlined_call_operand.hbm [shape: f32[8,128], index: 0, kind: input, shape index: {}]
  %s1 = inlined_call_operand.hbm [shape: f32[128,128], index: 1, kind: input, shape index: {}]
  %s2 = inlined_call_operand.vmem [shape: f32[1,128], index: 2, kind: input, shape index: {}]
  %s3 = inlined_call_operand.hbm [shape: f32[128,128], index: 3, kind: input, shape index: {}]
  %s4 = inlined_call_operand.vmem [shape: f32[1,128], index: 4, kind: input, shape index: {}]
  %s5 = inlined_call_operand.hbm [shape: f32[128,128], index: 5, kind: input, shape index: {}]
  %s6 = inlined_call_operand.vmem [shape: f32[1,128], index: 6, kind: input, shape index: {}]
  %s7 = inlined_call_operand.hbm [shape: f32[128,128], index: 7, kind: input, shape index: {}]
  %s8 = inlined_call_operand.vmem [shape: f32[1,128], index: 8, kind: input, shape index: {}]
  %s9 = inlined_call_operand.hbm [shape: f32[128,128], index: 9, kind: input, shape index: {}]
  %s10 = inlined_call_operand.vmem [shape: f32[1,128], index: 10, kind: input, shape index: {}]
  %s11 = inlined_call_operand.hbm [shape: f32[8,128], index: 11, kind: output, shape index: {0}]
  %s12 = inlined_call_operand.hbm [shape: f32[8,128], index: 12, kind: output, shape index: {1}]
  %13 = xla_tuple %s11, %s12
  %s14 = sld [smem:[#allocation0]]
  $region86: #{tpu_custom_call.1} parent=0
    _
  %s16 = ssub.s32 1, %s14
  %s17 = scalar_select 0, %s16, %s14
  $region1: #{tpu_custom_call.1} parent=0
    #allocation2 [shape = 'u8[4096]{0}', space=vmem, size = 0x1000, scoped, tag = 'input window, operand 0, single buffered']
    #allocation3 [shape = 's32[1]{0}', space=sflag, size = 0x4, scoped, tag = 'scoped memory for tpu_custom_call.1']
    #allocation4 [shape = 's32[1]{0}', space=sflag, size = 0x4, scoped, tag = 'scoped memory for tpu_custom_call.1']
    #allocation5 [shape = 'u8[65536]{0}', space=vmem, size = 0x10000, scoped, tag = 'input window, operand 1, single buffered']
    #allocation6 [shape = 's32[1]{0}', space=sflag, size = 0x4, scoped, tag = 'scoped memory for tpu_custom_call.1']
    #allocation7 [shape = 'u8[65536]{0}', space=vmem, size = 0x10000, scoped, tag = 'input window, operand 3, single buffered']
    #allocation8 [shape = 'u8[65536]{0}', space=vmem, size = 0x10000, scoped, tag = 'input window, operand 5, single buffered']
    #allocation9 [shape = 's32[1]{0}', space=sflag, size = 0x4, scoped, tag = 'scoped memory for tpu_custom_call.1']
    #allocation10 [shape = 'u8[65536]{0}', space=vmem, size = 0x10000, scoped, tag = 'input window, operand 7, single buffered']
    #allocation11 [shape = 'u8[65536]{0}', space=vmem, size = 0x10000, scoped, tag = 'input window, operand 9, single buffered']
    #allocation12 [shape = 's32[1]{0}', space=sflag, size = 0x4, scoped, tag = 'scoped memory for tpu_custom_call.1']
    #allocation13 [shape = 'u8[4096]{0}', space=vmem, size = 0x1000, scoped, tag = 'output window, operand 0, single buffered']
    #allocation14 [shape = 'u8[4096]{0}', space=vmem, size = 0x1000, scoped, tag = 'output window, operand 1, single buffered']
    #allocation15 [shape = 's32[1]{0}', space=sflag, size = 0x4, scoped, tag = 'scoped memory for tpu_custom_call.1']
    %18 = vsyncpa [#allocation3], 0
    %19 = vsyncpa [#allocation6], 0
    %20 = vsyncpa [#allocation9], 0
    %21 = vsyncpa [#allocation12], 0
    %22 = vsyncpa [#allocation4], 0
    %23 = vsyncpa [#allocation15], 0
    // Predicated region
    $region2: #{tpu_custom_call.1} parent=1 // pred_check
      _
    $region3: #{tpu_custom_call.1} parent=1 // pred_check_branch
      %25 = sbr.rel (0) target = $region5
    $region4: #{tpu_custom_call.1} parent=1 // pred_region
      %s27 = ssub.s32 128, 128
      %28 = vsyncadd [#allocation3], %s27
      %s30 = sshll.u32 [#allocation2], 4
      %s31 = int_to_ptr.vmem [resolvable:$true] %s30
      %33 = dma.hbm_to_vmem [thread:$0]  %s0, 128, %s31, [#allocation3]
    $region5: #{tpu_custom_call.1} parent=1 // pred_fallthru
      _
    // Predicated region
    $region6: #{tpu_custom_call.1} parent=1 // pred_check
      _
    $region7: #{tpu_custom_call.1} parent=1 // pred_check_branch
      %35 = sbr.rel (0) target = $region9
    $region8: #{tpu_custom_call.1} parent=1 // pred_region
      %s37 = ssub.s32 2048, 2048
      %38 = vsyncadd [#allocation6], %s37
      %s39 = sshll.u32 [#allocation5], 4
      %s40 = int_to_ptr.vmem [resolvable:$true] %s39
      %45 = dma.hbm_to_vmem [thread:$0]  %s1, 2048, %s40, [#allocation6], 128, 128, 8
    $region9: #{tpu_custom_call.1} parent=1 // pred_fallthru
      _
    // Predicated region
    $region10: #{tpu_custom_call.1} parent=1 // pred_check
      _
    $region11: #{tpu_custom_call.1} parent=1 // pred_check_branch
      %47 = sbr.rel (0) target = $region13
    $region12: #{tpu_custom_call.1} parent=1 // pred_region
      _
    $region13: #{tpu_custom_call.1} parent=1 // pred_fallthru
      _
    // Predicated region
    $region14: #{tpu_custom_call.1} parent=1 // pred_check
      _
    $region15: #{tpu_custom_call.1} parent=1 // pred_check_branch
      %49 = sbr.rel (0) target = $region17
    $region16: #{tpu_custom_call.1} parent=1 // pred_region
      %s51 = ssub.s32 2048, 2048
      %52 = vsyncadd [#allocation6], %s51
      %s53 = sshll.u32 [#allocation7], 4
      %s54 = int_to_ptr.vmem [resolvable:$true] %s53
      %59 = dma.hbm_to_vmem [thread:$0]  %s3, 2048, %s54, [#allocation6], 128, 128, 8
    $region17: #{tpu_custom_call.1} parent=1 // pred_fallthru
      _
    // Predicated region
    $region18: #{tpu_custom_call.1} parent=1 // pred_check
      _
    $region19: #{tpu_custom_call.1} parent=1 // pred_check_branch
      %61 = sbr.rel (0) target = $region21
    $region20: #{tpu_custom_call.1} parent=1 // pred_region
      _
    $region21: #{tpu_custom_call.1} parent=1 // pred_fallthru
      _
    // Predicated region
    $region22: #{tpu_custom_call.1} parent=1 // pred_check
      _
    $region23: #{tpu_custom_call.1} parent=1 // pred_check_branch
      %63 = sbr.rel (0) target = $region25
    $region24: #{tpu_custom_call.1} parent=1 // pred_region
      %s65 = ssub.s32 2048, 2048
      %66 = vsyncadd [#allocation9], %s65
      %s67 = sshll.u32 [#allocation8], 4
      %s68 = int_to_ptr.vmem [resolvable:$true] %s67
      %73 = dma.hbm_to_vmem [thread:$0]  %s5, 2048, %s68, [#allocation9], 128, 128, 8
    $region25: #{tpu_custom_call.1} parent=1 // pred_fallthru
      _
    // Predicated region
    $region26: #{tpu_custom_call.1} parent=1 // pred_check
      _
    $region27: #{tpu_custom_call.1} parent=1 // pred_check_branch
      %75 = sbr.rel (0) target = $region29
    $region28: #{tpu_custom_call.1} parent=1 // pred_region
      _
    $region29: #{tpu_custom_call.1} parent=1 // pred_fallthru
      _
    // Predicated region
    $region30: #{tpu_custom_call.1} parent=1 // pred_check
      _
    $region31: #{tpu_custom_call.1} parent=1 // pred_check_branch
      %77 = sbr.rel (0) target = $region33
    $region32: #{tpu_custom_call.1} parent=1 // pred_region
      %s79 = ssub.s32 2048, 2048
      %80 = vsyncadd [#allocation9], %s79
      %s81 = sshll.u32 [#allocation10], 4
      %s82 = int_to_ptr.vmem [resolvable:$true] %s81
      %87 = dma.hbm_to_vmem [thread:$0]  %s7, 2048, %s82, [#allocation9], 128, 128, 8
    $region33: #{tpu_custom_call.1} parent=1 // pred_fallthru
      _
    // Predicated region
    $region34: #{tpu_custom_call.1} parent=1 // pred_check
      _
    $region35: #{tpu_custom_call.1} parent=1 // pred_check_branch
      %89 = sbr.rel (0) target = $region37
    $region36: #{tpu_custom_call.1} parent=1 // pred_region
      _
    $region37: #{tpu_custom_call.1} parent=1 // pred_fallthru
      _
    // Predicated region
    $region38: #{tpu_custom_call.1} parent=1 // pred_check
      _
    $region39: #{tpu_custom_call.1} parent=1 // pred_check_branch
      %91 = sbr.rel (0) target = $region41
    $region40: #{tpu_custom_call.1} parent=1 // pred_region
      %s93 = ssub.s32 2048, 2048
      %94 = vsyncadd [#allocation12], %s93
      %s95 = sshll.u32 [#allocation11], 4
      %s96 = int_to_ptr.vmem [resolvable:$true] %s95
      %101 = dma.hbm_to_vmem [thread:$0]  %s9, 2048, %s96, [#allocation12], 128, 128, 8
    $region41: #{tpu_custom_call.1} parent=1 // pred_fallthru
      _
    // Predicated region
    $region42: #{tpu_custom_call.1} parent=1 // pred_check
      _
    $region43: #{tpu_custom_call.1} parent=1 // pred_check_branch
      %103 = sbr.rel (0) target = $region45
    $region44: #{tpu_custom_call.1} parent=1 // pred_region
      _
    $region45: #{tpu_custom_call.1} parent=1 // pred_fallthru
      _
    // Predicated region
    $region46: #{tpu_custom_call.1} parent=1 // pred_check
      _
    $region47: #{tpu_custom_call.1} parent=1 // pred_check_branch
      %105 = sbr.rel (0) target = $region49
    $region48: #{tpu_custom_call.1} parent=1 // pred_region
      %106 = dma.done [#allocation3], 128
    $region49: #{tpu_custom_call.1} parent=1 // pred_fallthru
      _
    // Predicated region
    $region50: #{tpu_custom_call.1} parent=1 // pred_check
      _
    $region51: #{tpu_custom_call.1} parent=1 // pred_check_branch
      %108 = sbr.rel (0) target = $region53
    $region52: #{tpu_custom_call.1} parent=1 // pred_region
      %109 = dma.done [#allocation6], 2048
    $region53: #{tpu_custom_call.1} parent=1 // pred_fallthru
      _
    // Predicated region
    $region54: #{tpu_custom_call.1} parent=1 // pred_check
      _
    $region55: #{tpu_custom_call.1} parent=1 // pred_check_branch
      %111 = sbr.rel (0) target = $region57
    $region56: #{tpu_custom_call.1} parent=1 // pred_region
      %112 = dma.done [#allocation6], 2048
    $region57: #{tpu_custom_call.1} parent=1 // pred_fallthru
      _
    // Predicated region
    $region58: #{tpu_custom_call.1} parent=1 // pred_check
      _
    $region59: #{tpu_custom_call.1} parent=1 // pred_check_branch
      %114 = sbr.rel (0) target = $region61
    $region60: #{tpu_custom_call.1} parent=1 // pred_region
      %115 = dma.done [#allocation9], 2048
    $region61: #{tpu_custom_call.1} parent=1 // pred_fallthru
      _
    // Predicated region
    $region62: #{tpu_custom_call.1} parent=1 // pred_check
      _
    $region63: #{tpu_custom_call.1} parent=1 // pred_check_branch
      %117 = sbr.rel (0) target = $region65
    $region64: #{tpu_custom_call.1} parent=1 // pred_region
      %118 = dma.done [#allocation9], 2048
    $region65: #{tpu_custom_call.1} parent=1 // pred_fallthru
      _
    // Predicated region
    $region66: #{tpu_custom_call.1} parent=1 // pred_check
      _
    $region67: #{tpu_custom_call.1} parent=1 // pred_check_branch
      %120 = sbr.rel (0) target = $region69
    $region68: #{tpu_custom_call.1} parent=1 // pred_region
      %121 = dma.done [#allocation12], 2048
    $region69: #{tpu_custom_call.1} parent=1 // pred_fallthru
      _
    %v122 = vld [vmem:[#allocation2] sm:$0xff]
    %v123 = vld [vmem:[#allocation5] sm:$0xff]
    %v124 = vld [vmem:[#allocation5 + $0x8] sm:$0xff]
    %v125 = vld [vmem:[#allocation5 + $0x10] sm:$0xff]
    %v126 = vld [vmem:[#allocation5 + $0x18] sm:$0xff]
    %v127 = vld [vmem:[#allocation5 + $0x20] sm:$0xff]
    %v128 = vld [vmem:[#allocation5 + $0x28] sm:$0xff]
    %v129 = vld [vmem:[#allocation5 + $0x30] sm:$0xff]
    %v130 = vld [vmem:[#allocation5 + $0x38] sm:$0xff]
    %v131 = vld [vmem:[#allocation5 + $0x40] sm:$0xff]
    %v132 = vld [vmem:[#allocation5 + $0x48] sm:$0xff]
    %v133 = vld [vmem:[#allocation5 + $0x50] sm:$0xff]
    %v134 = vld [vmem:[#allocation5 + $0x58] sm:$0xff]
    %v135 = vld [vmem:[#allocation5 + $0x60] sm:$0xff]
    %v136 = vld [vmem:[#allocation5 + $0x68] sm:$0xff]
    %v137 = vld [vmem:[#allocation5 + $0x70] sm:$0xff]
    %v138 = vld [vmem:[#allocation5 + $0x78] sm:$0xff]
    %v139 = vld [vmem:[%s2] sm:$0x1]
    %v141 = vlaneseq
    %v142 = vshrl.u32 %v141, 7
    %v143 = vsub.s32 0, %v142
    %v144 = vrot.slane %v139, %v143
    %146 = vmatprep.subr.mxu0 0.0
    %147 = vmatpush1.msra.mxu0 %v138
    %148 = vmatprep.subr.mxu0 0.0
    %149 = vmatpush1.msra.mxu0 %v137
    %150 = vmatprep.subr.mxu0 0.0
    %151 = vmatpush1.msra.mxu0 %v136
    %152 = vmatprep.subr.mxu0 0.0
    %153 = vmatpush1.msra.mxu0 %v135
    %154 = vmatprep.subr.mxu0 0.0
    %155 = vmatpush1.msra.mxu0 %v134
    %156 = vmatprep.subr.mxu0 0.0
    %157 = vmatpush1.msra.mxu0 %v133
    %158 = vmatprep.subr.mxu0 0.0
    %159 = vmatpush1.msra.mxu0 %v132
    %160 = vmatprep.subr.mxu0 0.0
    %161 = vmatpush1.msra.mxu0 %v131
    %162 = vmatprep.subr.mxu0 0.0
    %163 = vmatpush1.msra.mxu0 %v130
    %164 = vmatprep.subr.mxu0 0.0
    %165 = vmatpush1.msra.mxu0 %v129
    %166 = vmatprep.subr.mxu0 0.0
    %167 = vmatpush1.msra.mxu0 %v128
    %168 = vmatprep.subr.mxu0 0.0
    %169 = vmatpush1.msra.mxu0 %v127
    %170 = vmatprep.subr.mxu0 0.0
    %171 = vmatpush1.msra.mxu0 %v126
    %172 = vmatprep.subr.mxu0 0.0
    %173 = vmatpush1.msra.mxu0 %v125
    %174 = vmatprep.subr.mxu0 0.0
    %175 = vmatpush1.msra.mxu0 %v124
    %176 = vmatprep.subr.mxu0 0.0
    %177 = vmatpush1.msra.mxu0 %v123
    %178 = vmatprep.subr.mxu0 0.0
    %179 = vmatpush2.msra.mxu0 0.0
    %180 = vmatprep.subr.mxu0 0.0
    %181 = vmatpush2.msra.mxu0 0.0
    %182 = vmatprep.subr.mxu0 0.0
    %183 = vmatpush2.msra.mxu0 0.0
    %184 = vmatprep.subr.mxu0 0.0
    %185 = vmatpush2.msra.mxu0 0.0
    %186 = vmatprep.subr.mxu0 0.0
    %187 = vmatpush2.msra.mxu0 0.0
    %188 = vmatprep.subr.mxu0 0.0
    %189 = vmatpush2.msra.mxu0 0.0
    %190 = vmatprep.subr.mxu0 0.0
    %191 = vmatpush2.msra.mxu0 0.0
    %192 = vmatprep.subr.mxu0 0.0
    %193 = vmatpush2.msra.mxu0 0.0
    %194 = vmatprep.subr.mxu0 0.0
    %195 = vmatpush2.msra.mxu0 0.0
    %196 = vmatprep.subr.mxu0 0.0
    %197 = vmatpush2.msra.mxu0 0.0
    %198 = vmatprep.subr.mxu0 0.0
    %199 = vmatpush2.msra.mxu0 0.0
    %200 = vmatprep.subr.mxu0 0.0
    %201 = vmatpush2.msra.mxu0 0.0
    %202 = vmatprep.subr.mxu0 0.0
    %203 = vmatpush2.msra.mxu0 0.0
    %204 = vmatprep.subr.mxu0 0.0
    %205 = vmatpush2.msra.mxu0 0.0
    %206 = vmatprep.subr.mxu0 0.0
    %207 = vmatpush2.msra.mxu0 0.0
    %208 = vmatprep.subr.mxu0 0.0
    %209 = vmatpush2.msra.mxu0 0.0
    %210 = vmatprep.mubr.f32.mxu0 0.0
    %211 = vmatmul.mubr.f32.gmra.mxu0 %v122
    %v212 = vpop.f32.mrf.mxu0
    %v213 = vadd.f32 %v144, %v212
    %v214 = vpop.f32.mrf.mxu0
    %215 = vdwg.mxu0
    %vm216 = vcmp.gt.f32.partialorder %v213, 0.0
    %v217 = vmul.f32 %v213, 0.2
    %v218 = vsel %vm216, %v213, %v217
    %v219 = vld [vmem:[#allocation7] sm:$0xff]
    %v220 = vld [vmem:[#allocation7 + $0x8] sm:$0xff]
    %v221 = vld [vmem:[#allocation7 + $0x10] sm:$0xff]
    %v222 = vld [vmem:[#allocation7 + $0x18] sm:$0xff]
    %v223 = vld [vmem:[#allocation7 + $0x20] sm:$0xff]
    %v224 = vld [vmem:[#allocation7 + $0x28] sm:$0xff]
    %v225 = vld [vmem:[#allocation7 + $0x30] sm:$0xff]
    %v226 = vld [vmem:[#allocation7 + $0x38] sm:$0xff]
    %v227 = vld [vmem:[#allocation7 + $0x40] sm:$0xff]
    %v228 = vld [vmem:[#allocation7 + $0x48] sm:$0xff]
    %v229 = vld [vmem:[#allocation7 + $0x50] sm:$0xff]
    %v230 = vld [vmem:[#allocation7 + $0x58] sm:$0xff]
    %v231 = vld [vmem:[#allocation7 + $0x60] sm:$0xff]
    %v232 = vld [vmem:[#allocation7 + $0x68] sm:$0xff]
    %v233 = vld [vmem:[#allocation7 + $0x70] sm:$0xff]
    %v234 = vld [vmem:[#allocation7 + $0x78] sm:$0xff]
    %v235 = vld [vmem:[%s4] sm:$0x1]
    %v237 = vlaneseq
    %v238 = vshrl.u32 %v237, 7
    %v239 = vsub.s32 0, %v238
    %v240 = vrot.slane %v235, %v239
    %242 = vmatprep.subr.mxu0 0.0
    %243 = vmatpush1.msra.mxu0 %v234
    %244 = vmatprep.subr.mxu0 0.0
    %245 = vmatpush1.msra.mxu0 %v233
    %246 = vmatprep.subr.mxu0 0.0
    %247 = vmatpush1.msra.mxu0 %v232
    %248 = vmatprep.subr.mxu0 0.0
    %249 = vmatpush1.msra.mxu0 %v231
    %250 = vmatprep.subr.mxu0 0.0
    %251 = vmatpush1.msra.mxu0 %v230
    %252 = vmatprep.subr.mxu0 0.0
    %253 = vmatpush1.msra.mxu0 %v229
    %254 = vmatprep.subr.mxu0 0.0
    %255 = vmatpush1.msra.mxu0 %v228
    %256 = vmatprep.subr.mxu0 0.0
    %257 = vmatpush1.msra.mxu0 %v227
    %258 = vmatprep.subr.mxu0 0.0
    %259 = vmatpush1.msra.mxu0 %v226
    %260 = vmatprep.subr.mxu0 0.0
    %261 = vmatpush1.msra.mxu0 %v225
    %262 = vmatprep.subr.mxu0 0.0
    %263 = vmatpush1.msra.mxu0 %v224
    %264 = vmatprep.subr.mxu0 0.0
    %265 = vmatpush1.msra.mxu0 %v223
    %266 = vmatprep.subr.mxu0 0.0
    %267 = vmatpush1.msra.mxu0 %v222
    %268 = vmatprep.subr.mxu0 0.0
    %269 = vmatpush1.msra.mxu0 %v221
    %270 = vmatprep.subr.mxu0 0.0
    %271 = vmatpush1.msra.mxu0 %v220
    %272 = vmatprep.subr.mxu0 0.0
    %273 = vmatpush1.msra.mxu0 %v219
    %274 = vmatprep.subr.mxu0 0.0
    %275 = vmatpush2.msra.mxu0 0.0
    %276 = vmatprep.subr.mxu0 0.0
    %277 = vmatpush2.msra.mxu0 0.0
    %278 = vmatprep.subr.mxu0 0.0
    %279 = vmatpush2.msra.mxu0 0.0
    %280 = vmatprep.subr.mxu0 0.0
    %281 = vmatpush2.msra.mxu0 0.0
    %282 = vmatprep.subr.mxu0 0.0
    %283 = vmatpush2.msra.mxu0 0.0
    %284 = vmatprep.subr.mxu0 0.0
    %285 = vmatpush2.msra.mxu0 0.0
    %286 = vmatprep.subr.mxu0 0.0
    %287 = vmatpush2.msra.mxu0 0.0
    %288 = vmatprep.subr.mxu0 0.0
    %289 = vmatpush2.msra.mxu0 0.0
    %290 = vmatprep.subr.mxu0 0.0
    %291 = vmatpush2.msra.mxu0 0.0
    %292 = vmatprep.subr.mxu0 0.0
    %293 = vmatpush2.msra.mxu0 0.0
    %294 = vmatprep.subr.mxu0 0.0
    %295 = vmatpush2.msra.mxu0 0.0
    %296 = vmatprep.subr.mxu0 0.0
    %297 = vmatpush2.msra.mxu0 0.0
    %298 = vmatprep.subr.mxu0 0.0
    %299 = vmatpush2.msra.mxu0 0.0
    %300 = vmatprep.subr.mxu0 0.0
    %301 = vmatpush2.msra.mxu0 0.0
    %302 = vmatprep.subr.mxu0 0.0
    %303 = vmatpush2.msra.mxu0 0.0
    %304 = vmatprep.subr.mxu0 0.0
    %305 = vmatpush2.msra.mxu0 0.0
    %306 = vmatprep.mubr.f32.mxu0 0.0
    %307 = vmatmul.mubr.f32.gmra.mxu0 %v218
    %v308 = vpop.f32.mrf.mxu0
    %v309 = vadd.f32 %v240, %v308
    %v310 = vpop.f32.mrf.mxu0
    %311 = vdwg.mxu0
    %vm312 = vcmp.gt.f32.partialorder %v309, 0.0
    %v313 = vmul.f32 %v309, 0.2
    %v314 = vsel %vm312, %v309, %v313
    %v315 = vld [vmem:[#allocation8] sm:$0xff]
    %v316 = vld [vmem:[#allocation8 + $0x8] sm:$0xff]
    %v317 = vld [vmem:[#allocation8 + $0x10] sm:$0xff]
    %v318 = vld [vmem:[#allocation8 + $0x18] sm:$0xff]
    %v319 = vld [vmem:[#allocation8 + $0x20] sm:$0xff]
    %v320 = vld [vmem:[#allocation8 + $0x28] sm:$0xff]
    %v321 = vld [vmem:[#allocation8 + $0x30] sm:$0xff]
    %v322 = vld [vmem:[#allocation8 + $0x38] sm:$0xff]
    %v323 = vld [vmem:[#allocation8 + $0x40] sm:$0xff]
    %v324 = vld [vmem:[#allocation8 + $0x48] sm:$0xff]
    %v325 = vld [vmem:[#allocation8 + $0x50] sm:$0xff]
    %v326 = vld [vmem:[#allocation8 + $0x58] sm:$0xff]
    %v327 = vld [vmem:[#allocation8 + $0x60] sm:$0xff]
    %v328 = vld [vmem:[#allocation8 + $0x68] sm:$0xff]
    %v329 = vld [vmem:[#allocation8 + $0x70] sm:$0xff]
    %v330 = vld [vmem:[#allocation8 + $0x78] sm:$0xff]
    %v331 = vld [vmem:[%s6] sm:$0x1]
    %v333 = vlaneseq
    %v334 = vshrl.u32 %v333, 7
    %v335 = vsub.s32 0, %v334
    %v336 = vrot.slane %v331, %v335
    %338 = vmatprep.subr.mxu0 0.0
    %339 = vmatpush1.msra.mxu0 %v330
    %340 = vmatprep.subr.mxu0 0.0
    %341 = vmatpush1.msra.mxu0 %v329
    %342 = vmatprep.subr.mxu0 0.0
    %343 = vmatpush1.msra.mxu0 %v328
    %344 = vmatprep.subr.mxu0 0.0
    %345 = vmatpush1.msra.mxu0 %v327
    %346 = vmatprep.subr.mxu0 0.0
    %347 = vmatpush1.msra.mxu0 %v326
    %348 = vmatprep.subr.mxu0 0.0
    %349 = vmatpush1.msra.mxu0 %v325
    %350 = vmatprep.subr.mxu0 0.0
    %351 = vmatpush1.msra.mxu0 %v324
    %352 = vmatprep.subr.mxu0 0.0
    %353 = vmatpush1.msra.mxu0 %v323
    %354 = vmatprep.subr.mxu0 0.0
    %355 = vmatpush1.msra.mxu0 %v322
    %356 = vmatprep.subr.mxu0 0.0
    %357 = vmatpush1.msra.mxu0 %v321
    %358 = vmatprep.subr.mxu0 0.0
    %359 = vmatpush1.msra.mxu0 %v320
    %360 = vmatprep.subr.mxu0 0.0
    %361 = vmatpush1.msra.mxu0 %v319
    %362 = vmatprep.subr.mxu0 0.0
    %363 = vmatpush1.msra.mxu0 %v318
    %364 = vmatprep.subr.mxu0 0.0
    %365 = vmatpush1.msra.mxu0 %v317
    %366 = vmatprep.subr.mxu0 0.0
    %367 = vmatpush1.msra.mxu0 %v316
    %368 = vmatprep.subr.mxu0 0.0
    %369 = vmatpush1.msra.mxu0 %v315
    %370 = vmatprep.subr.mxu0 0.0
    %371 = vmatpush2.msra.mxu0 0.0
    %372 = vmatprep.subr.mxu0 0.0
    %373 = vmatpush2.msra.mxu0 0.0
    %374 = vmatprep.subr.mxu0 0.0
    %375 = vmatpush2.msra.mxu0 0.0
    %376 = vmatprep.subr.mxu0 0.0
    %377 = vmatpush2.msra.mxu0 0.0
    %378 = vmatprep.subr.mxu0 0.0
    %379 = vmatpush2.msra.mxu0 0.0
    %380 = vmatprep.subr.mxu0 0.0
    %381 = vmatpush2.msra.mxu0 0.0
    %382 = vmatprep.subr.mxu0 0.0
    %383 = vmatpush2.msra.mxu0 0.0
    %384 = vmatprep.subr.mxu0 0.0
    %385 = vmatpush2.msra.mxu0 0.0
    %386 = vmatprep.subr.mxu0 0.0
    %387 = vmatpush2.msra.mxu0 0.0
    %388 = vmatprep.subr.mxu0 0.0
    %389 = vmatpush2.msra.mxu0 0.0
    %390 = vmatprep.subr.mxu0 0.0
    %391 = vmatpush2.msra.mxu0 0.0
    %392 = vmatprep.subr.mxu0 0.0
    %393 = vmatpush2.msra.mxu0 0.0
    %394 = vmatprep.subr.mxu0 0.0
    %395 = vmatpush2.msra.mxu0 0.0
    %396 = vmatprep.subr.mxu0 0.0
    %397 = vmatpush2.msra.mxu0 0.0
    %398 = vmatprep.subr.mxu0 0.0
    %399 = vmatpush2.msra.mxu0 0.0
    %400 = vmatprep.subr.mxu0 0.0
    %401 = vmatpush2.msra.mxu0 0.0
    %402 = vmatprep.mubr.f32.mxu0 0.0
    %403 = vmatmul.mubr.f32.gmra.mxu0 %v314
    %v404 = vpop.f32.mrf.mxu0
    %v405 = vadd.f32 %v336, %v404
    %v406 = vpop.f32.mrf.mxu0
    %407 = vdwg.mxu0
    %vm408 = vcmp.gt.f32.partialorder %v405, 0.0
    %v409 = vmul.f32 %v405, 0.2
    %v410 = vsel %vm408, %v405, %v409
    %v411 = vld [vmem:[#allocation10] sm:$0xff]
    %v412 = vld [vmem:[#allocation10 + $0x8] sm:$0xff]
    %v413 = vld [vmem:[#allocation10 + $0x10] sm:$0xff]
    %v414 = vld [vmem:[#allocation10 + $0x18] sm:$0xff]
    %v415 = vld [vmem:[#allocation10 + $0x20] sm:$0xff]
    %v416 = vld [vmem:[#allocation10 + $0x28] sm:$0xff]
    %v417 = vld [vmem:[#allocation10 + $0x30] sm:$0xff]
    %v418 = vld [vmem:[#allocation10 + $0x38] sm:$0xff]
    %v419 = vld [vmem:[#allocation10 + $0x40] sm:$0xff]
    %v420 = vld [vmem:[#allocation10 + $0x48] sm:$0xff]
    %v421 = vld [vmem:[#allocation10 + $0x50] sm:$0xff]
    %v422 = vld [vmem:[#allocation10 + $0x58] sm:$0xff]
    %v423 = vld [vmem:[#allocation10 + $0x60] sm:$0xff]
    %v424 = vld [vmem:[#allocation10 + $0x68] sm:$0xff]
    %v425 = vld [vmem:[#allocation10 + $0x70] sm:$0xff]
    %v426 = vld [vmem:[#allocation10 + $0x78] sm:$0xff]
    %v427 = vld [vmem:[%s8] sm:$0x1]
    %v429 = vlaneseq
    %v430 = vshrl.u32 %v429, 7
    %v431 = vsub.s32 0, %v430
    %v432 = vrot.slane %v427, %v431
    %434 = vmatprep.subr.mxu0 0.0
    %435 = vmatpush1.msra.mxu0 %v426
    %436 = vmatprep.subr.mxu0 0.0
    %437 = vmatpush1.msra.mxu0 %v425
    %438 = vmatprep.subr.mxu0 0.0
    %439 = vmatpush1.msra.mxu0 %v424
    %440 = vmatprep.subr.mxu0 0.0
    %441 = vmatpush1.msra.mxu0 %v423
    %442 = vmatprep.subr.mxu0 0.0
    %443 = vmatpush1.msra.mxu0 %v422
    %444 = vmatprep.subr.mxu0 0.0
    %445 = vmatpush1.msra.mxu0 %v421
    %446 = vmatprep.subr.mxu0 0.0
    %447 = vmatpush1.msra.mxu0 %v420
    %448 = vmatprep.subr.mxu0 0.0
    %449 = vmatpush1.msra.mxu0 %v419
    %450 = vmatprep.subr.mxu0 0.0
    %451 = vmatpush1.msra.mxu0 %v418
    %452 = vmatprep.subr.mxu0 0.0
    %453 = vmatpush1.msra.mxu0 %v417
    %454 = vmatprep.subr.mxu0 0.0
    %455 = vmatpush1.msra.mxu0 %v416
    %456 = vmatprep.subr.mxu0 0.0
    %457 = vmatpush1.msra.mxu0 %v415
    %458 = vmatprep.subr.mxu0 0.0
    %459 = vmatpush1.msra.mxu0 %v414
    %460 = vmatprep.subr.mxu0 0.0
    %461 = vmatpush1.msra.mxu0 %v413
    %462 = vmatprep.subr.mxu0 0.0
    %463 = vmatpush1.msra.mxu0 %v412
    %464 = vmatprep.subr.mxu0 0.0
    %465 = vmatpush1.msra.mxu0 %v411
    %466 = vmatprep.subr.mxu0 0.0
    %467 = vmatpush2.msra.mxu0 0.0
    %468 = vmatprep.subr.mxu0 0.0
    %469 = vmatpush2.msra.mxu0 0.0
    %470 = vmatprep.subr.mxu0 0.0
    %471 = vmatpush2.msra.mxu0 0.0
    %472 = vmatprep.subr.mxu0 0.0
    %473 = vmatpush2.msra.mxu0 0.0
    %474 = vmatprep.subr.mxu0 0.0
    %475 = vmatpush2.msra.mxu0 0.0
    %476 = vmatprep.subr.mxu0 0.0
    %477 = vmatpush2.msra.mxu0 0.0
    %478 = vmatprep.subr.mxu0 0.0
    %479 = vmatpush2.msra.mxu0 0.0
    %480 = vmatprep.subr.mxu0 0.0
    %481 = vmatpush2.msra.mxu0 0.0
    %482 = vmatprep.subr.mxu0 0.0
    %483 = vmatpush2.msra.mxu0 0.0
    %484 = vmatprep.subr.mxu0 0.0
    %485 = vmatpush2.msra.mxu0 0.0
    %486 = vmatprep.subr.mxu0 0.0
    %487 = vmatpush2.msra.mxu0 0.0
    %488 = vmatprep.subr.mxu0 0.0
    %489 = vmatpush2.msra.mxu0 0.0
    %490 = vmatprep.subr.mxu0 0.0
    %491 = vmatpush2.msra.mxu0 0.0
    %492 = vmatprep.subr.mxu0 0.0
    %493 = vmatpush2.msra.mxu0 0.0
    %494 = vmatprep.subr.mxu0 0.0
    %495 = vmatpush2.msra.mxu0 0.0
    %496 = vmatprep.subr.mxu0 0.0
    %497 = vmatpush2.msra.mxu0 0.0
    %498 = vmatprep.mubr.f32.mxu0 0.0
    %499 = vmatmul.mubr.f32.gmra.mxu0 %v410
    %v500 = vpop.f32.mrf.mxu0
    %v501 = vadd.f32 %v432, %v500
    %v502 = vpop.f32.mrf.mxu0
    %503 = vdwg.mxu0
    %504 = vst [vmem:[#allocation13] sm:$0xff] %v501
    %v505 = vld [vmem:[#allocation11] sm:$0xff]
    %v506 = vld [vmem:[#allocation11 + $0x8] sm:$0xff]
    %v507 = vld [vmem:[#allocation11 + $0x10] sm:$0xff]
    %v508 = vld [vmem:[#allocation11 + $0x18] sm:$0xff]
    %v509 = vld [vmem:[#allocation11 + $0x20] sm:$0xff]
    %v510 = vld [vmem:[#allocation11 + $0x28] sm:$0xff]
    %v511 = vld [vmem:[#allocation11 + $0x30] sm:$0xff]
    %v512 = vld [vmem:[#allocation11 + $0x38] sm:$0xff]
    %v513 = vld [vmem:[#allocation11 + $0x40] sm:$0xff]
    %v514 = vld [vmem:[#allocation11 + $0x48] sm:$0xff]
    %v515 = vld [vmem:[#allocation11 + $0x50] sm:$0xff]
    %v516 = vld [vmem:[#allocation11 + $0x58] sm:$0xff]
    %v517 = vld [vmem:[#allocation11 + $0x60] sm:$0xff]
    %v518 = vld [vmem:[#allocation11 + $0x68] sm:$0xff]
    %v519 = vld [vmem:[#allocation11 + $0x70] sm:$0xff]
    %v520 = vld [vmem:[#allocation11 + $0x78] sm:$0xff]
    %v521 = vld [vmem:[%s10] sm:$0x1]
    %v523 = vlaneseq
    %v524 = vshrl.u32 %v523, 7
    %v525 = vsub.s32 0, %v524
    %v526 = vrot.slane %v521, %v525
    %528 = vmatprep.subr.mxu0 0.0
    %529 = vmatpush1.msra.mxu0 %v520
    %530 = vmatprep.subr.mxu0 0.0
    %531 = vmatpush1.msra.mxu0 %v519
    %532 = vmatprep.subr.mxu0 0.0
    %533 = vmatpush1.msra.mxu0 %v518
    %534 = vmatprep.subr.mxu0 0.0
    %535 = vmatpush1.msra.mxu0 %v517
    %536 = vmatprep.subr.mxu0 0.0
    %537 = vmatpush1.msra.mxu0 %v516
    %538 = vmatprep.subr.mxu0 0.0
    %539 = vmatpush1.msra.mxu0 %v515
    %540 = vmatprep.subr.mxu0 0.0
    %541 = vmatpush1.msra.mxu0 %v514
    %542 = vmatprep.subr.mxu0 0.0
    %543 = vmatpush1.msra.mxu0 %v513
    %544 = vmatprep.subr.mxu0 0.0
    %545 = vmatpush1.msra.mxu0 %v512
    %546 = vmatprep.subr.mxu0 0.0
    %547 = vmatpush1.msra.mxu0 %v511
    %548 = vmatprep.subr.mxu0 0.0
    %549 = vmatpush1.msra.mxu0 %v510
    %550 = vmatprep.subr.mxu0 0.0
    %551 = vmatpush1.msra.mxu0 %v509
    %552 = vmatprep.subr.mxu0 0.0
    %553 = vmatpush1.msra.mxu0 %v508
    %554 = vmatprep.subr.mxu0 0.0
    %555 = vmatpush1.msra.mxu0 %v507
    %556 = vmatprep.subr.mxu0 0.0
    %557 = vmatpush1.msra.mxu0 %v506
    %558 = vmatprep.subr.mxu0 0.0
    %559 = vmatpush1.msra.mxu0 %v505
    %560 = vmatprep.subr.mxu0 0.0
    %561 = vmatpush2.msra.mxu0 0.0
    %562 = vmatprep.subr.mxu0 0.0
    %563 = vmatpush2.msra.mxu0 0.0
    %564 = vmatprep.subr.mxu0 0.0
    %565 = vmatpush2.msra.mxu0 0.0
    %566 = vmatprep.subr.mxu0 0.0
    %567 = vmatpush2.msra.mxu0 0.0
    %568 = vmatprep.subr.mxu0 0.0
    %569 = vmatpush2.msra.mxu0 0.0
    %570 = vmatprep.subr.mxu0 0.0
    %571 = vmatpush2.msra.mxu0 0.0
    %572 = vmatprep.subr.mxu0 0.0
    %573 = vmatpush2.msra.mxu0 0.0
    %574 = vmatprep.subr.mxu0 0.0
    %575 = vmatpush2.msra.mxu0 0.0
    %576 = vmatprep.subr.mxu0 0.0
    %577 = vmatpush2.msra.mxu0 0.0
    %578 = vmatprep.subr.mxu0 0.0
    %579 = vmatpush2.msra.mxu0 0.0
    %580 = vmatprep.subr.mxu0 0.0
    %581 = vmatpush2.msra.mxu0 0.0
    %582 = vmatprep.subr.mxu0 0.0
    %583 = vmatpush2.msra.mxu0 0.0
    %584 = vmatprep.subr.mxu0 0.0
    %585 = vmatpush2.msra.mxu0 0.0
    %586 = vmatprep.subr.mxu0 0.0
    %587 = vmatpush2.msra.mxu0 0.0
    %588 = vmatprep.subr.mxu0 0.0
    %589 = vmatpush2.msra.mxu0 0.0
    %590 = vmatprep.subr.mxu0 0.0
    %591 = vmatpush2.msra.mxu0 0.0
    %592 = vmatprep.mubr.f32.mxu0 0.0
    %593 = vmatmul.mubr.f32.gmra.mxu0 %v410
    %v594 = vpop.f32.mrf.mxu0
    %v595 = vadd.f32 %v526, %v594
    %v596 = vpop.f32.mrf.mxu0
    %597 = vdwg.mxu0
    %598 = vst [vmem:[#allocation14] sm:$0xff] %v595
    // Predicated region
    $region70: #{tpu_custom_call.1} parent=1 // pred_check
      _
    $region71: #{tpu_custom_call.1} parent=1 // pred_check_branch
      %600 = sbr.rel (0) target = $region73
    $region72: #{tpu_custom_call.1} parent=1 // pred_region
      %s602 = ssub.s32 128, 128
      %603 = vsyncadd [#allocation4], %s602
      %s605 = sshll.u32 [#allocation13], 4
      %s606 = int_to_ptr.vmem [resolvable:$true] %s605
      %608 = dma.vmem_to_hbm [thread:$0]  %s606, 128, %s11, [#allocation4]
    $region73: #{tpu_custom_call.1} parent=1 // pred_fallthru
      _
    // Predicated region
    $region74: #{tpu_custom_call.1} parent=1 // pred_check
      _
    $region75: #{tpu_custom_call.1} parent=1 // pred_check_branch
      %610 = sbr.rel (0) target = $region77
    $region76: #{tpu_custom_call.1} parent=1 // pred_region
      %s612 = ssub.s32 128, 128
      %613 = vsyncadd [#allocation15], %s612
      %s615 = sshll.u32 [#allocation14], 4
      %s616 = int_to_ptr.vmem [resolvable:$true] %s615
      %618 = dma.vmem_to_hbm [thread:$0]  %s616, 128, %s12, [#allocation15]
    $region77: #{tpu_custom_call.1} parent=1 // pred_fallthru
      _
    // Predicated region
    $region78: #{tpu_custom_call.1} parent=1 // pred_check
      _
    $region79: #{tpu_custom_call.1} parent=1 // pred_check_branch
      %620 = sbr.rel (0) target = $region81
    $region80: #{tpu_custom_call.1} parent=1 // pred_region
      %621 = dma.done [#allocation4], 128
    $region81: #{tpu_custom_call.1} parent=1 // pred_fallthru
      _
    // Predicated region
    $region82: #{tpu_custom_call.1} parent=1 // pred_check
      _
    $region83: #{tpu_custom_call.1} parent=1 // pred_check_branch
      %623 = sbr.rel (0) target = $region85
    $region84: #{tpu_custom_call.1} parent=1 // pred_region
      %624 = dma.done [#allocation15], 128
    $region85: #{tpu_custom_call.1} parent=1 // pred_fallthru
      _
    %625 = vsyncpa [#allocation3], 1
    %626 = vsyncpa [#allocation6], 1
    %627 = vsyncpa [#allocation9], 1
    %628 = vsyncpa [#allocation12], 1
    %629 = vsyncpa [#allocation4], 1
    %630 = vsyncpa [#allocation15], 1

</llo_original>
